<compile_context>
chip_gen: v7x
topology: tpu7x:2x2x1
jax: 0.10.0
libtpu: 0.0.40
codegen_flags: <defaults>
</compile_context>

<pallas_src>
import functools
import math

import jax
import jax.numpy as jnp
from jax.experimental import pallas as pl
from jax.experimental.pallas import tpu as pltpu

LANE = 128


def _round_up(n, m):
    return -(-n // m) * m


# ---------------------------------------------------------------------------
# Fused Pallas kernel: (Linear+BN+ReLU) * n_hidden  ->  Linear
# refs = (x, [w, scale, shift] * n_hidden, w_out, b_out, o)
# ---------------------------------------------------------------------------
def _fused_mlp_kernel(*refs, n_hidden):
    x_ref = refs[0]
    o_ref = refs[-1]
    h = x_ref[...]
    idx = 1
    for _ in range(n_hidden):
        w_ref, scale_ref, shift_ref = refs[idx], refs[idx + 1], refs[idx + 2]
        idx += 3
        y = jnp.dot(h, w_ref[...], preferred_element_type=jnp.float32)
        # BatchNorm1d (eval) + linear bias folded into per-feature scale/shift.
        h = jnp.maximum(y * scale_ref[...] + shift_ref[...], 0.0)
        # Dropout (eval mode) == identity.
    w_out_ref, b_out_ref = refs[idx], refs[idx + 1]
    y = jnp.dot(h, w_out_ref[...], preferred_element_type=jnp.float32)
    o_ref[...] = (y + b_out_ref[...]).astype(o_ref.dtype)


# ---------------------------------------------------------------------------
# Parameter construction (deterministic, mirrors PyTorch default inits).
# Returns (padded_params_for_kernel, raw_params_for_reference).
# ---------------------------------------------------------------------------
def init_mlp_params(key, input_size, hidden_layer_size, hidden_layers,
                    output_size):
    in_pad = _round_up(input_size, LANE)
    hid_pad = _round_up(hidden_layer_size, LANE)
    out_pad = _round_up(output_size, LANE)
    eps = 1e-5

    def linear_init(key, fan_in, fan_out):
        kw, kb = jax.random.split(key)
        bound = 1.0 / math.sqrt(fan_in)
        # PyTorch stores (out, in); we keep (in, out) so the kernel does x @ W.
        w = jax.random.uniform(kw, (fan_in, fan_out), jnp.float32,
                               minval=-bound, maxval=bound)
        b = jax.random.uniform(kb, (1, fan_out), jnp.float32,
                               minval=-bound, maxval=bound)
        return w, b

    raw = {"hw": [], "hb": [], "hscale": [], "hshift": [],
           "wo": None, "bo": None}
    padded = {"hw": [], "hscale": [], "hshift": [], "wo": None, "bo": None}

    dims = [input_size] + [hidden_layer_size] * hidden_layers
    pdims = [in_pad] + [hid_pad] * hidden_layers
    for i in range(hidden_layers):
        key, k_lin, k_g, k_b = jax.random.split(key, 4)
        w, b = linear_init(k_lin, dims[i], dims[i + 1])
        # BatchNorm1d (eval): gamma/beta learned, running stats at fresh-init
        # values (mean=0, var=1); small perturbation keeps the affine
        # non-trivial but deterministic.
        gamma = 1.0 + 0.1 * jax.random.normal(k_g, (1, dims[i + 1]), jnp.float32)
        beta = 0.1 * jax.random.normal(k_b, (1, dims[i + 1]), jnp.float32)
        running_mean = jnp.zeros((1, dims[i + 1]), jnp.float32)
        running_var = jnp.ones((1, dims[i + 1]), jnp.float32)
        scale = gamma / jnp.sqrt(running_var + eps)
        shift = beta - running_mean * scale

        raw["hw"].append(w)
        raw["hb"].append(b)
        raw["hscale"].append(scale)
        raw["hshift"].append(shift)

        # Fold the linear bias into the BN shift, then zero-pad to lane-dense
        # shapes (padded rows/cols are zero -> padded hidden units stay 0).
        shift_folded = b * scale + shift
        padded["hw"].append(jnp.pad(
            w, ((0, pdims[i] - dims[i]), (0, pdims[i + 1] - dims[i + 1]))))
        padded["hscale"].append(jnp.pad(
            scale, ((0, 0), (0, pdims[i + 1] - dims[i + 1]))))
        padded["hshift"].append(jnp.pad(
            shift_folded, ((0, 0), (0, pdims[i + 1] - dims[i + 1]))))

    key, k_out = jax.random.split(key)
    w_out, b_out = linear_init(k_out, hidden_layer_size, output_size)
    raw["wo"], raw["bo"] = w_out, b_out
    padded["wo"] = jnp.pad(w_out, ((0, hid_pad - hidden_layer_size),
                                   (0, out_pad - output_size)))
    padded["bo"] = jnp.pad(b_out, ((0, 0), (0, out_pad - output_size)))
    return padded, raw


# ---------------------------------------------------------------------------
# Forward pass: one fused pallas_call over a batch grid.
# ---------------------------------------------------------------------------
@functools.partial(jax.jit, static_argnames=("output_size",))
def mlp_forward(x, params, output_size):
    n_hidden = len(params["hw"])
    in_pad = params["hw"][0].shape[0]
    out_pad = params["wo"].shape[1]
    B, Fin = x.shape

    # Batch tile: lane-dense features, sublane-aligned batch.
    tm = min(256, _round_up(B, 8))
    Bp = _round_up(B, tm)
    xp = jnp.pad(x.astype(jnp.float32), ((0, Bp - B), (0, in_pad - Fin)))

    flat_inputs = [xp]
    in_specs = [pl.BlockSpec((tm, in_pad), lambda i: (i, 0))]
    for w, s, sh in zip(params["hw"], params["hscale"], params["hshift"]):
        flat_inputs += [w, s, sh]
        in_specs += [
            pl.BlockSpec(w.shape, lambda i: (0, 0)),   # whole weight in VMEM
            pl.BlockSpec(s.shape, lambda i: (0, 0)),
            pl.BlockSpec(sh.shape, lambda i: (0, 0)),
        ]
    flat_inputs += [params["wo"], params["bo"]]
    in_specs += [
        pl.BlockSpec(params["wo"].shape, lambda i: (0, 0)),
        pl.BlockSpec(params["bo"].shape, lambda i: (0, 0)),
    ]

    out = pl.pallas_call(
        functools.partial(_fused_mlp_kernel, n_hidden=n_hidden),
        out_shape=jax.ShapeDtypeStruct((Bp, out_pad), jnp.float32),
        grid=(Bp // tm,),
        in_specs=in_specs,
        out_specs=pl.BlockSpec((tm, out_pad), lambda i: (i, 0)),
        compiler_params=pltpu.CompilerParams(
            dimension_semantics=("parallel",)),
    )(*flat_inputs)
    return out[:B, :output_size]


# Pure-JAX reference (un-padded, un-folded parameters) for a sanity check.
def mlp_forward_ref(x, raw):
    h = x
    for w, b, scale, shift in zip(raw["hw"], raw["hb"],
                                  raw["hscale"], raw["hshift"]):
        h = jnp.maximum((h @ w + b) * scale + shift, 0.0)
    return h @ raw["wo"] + raw["bo"]


if __name__ == "__main__":
    key = jax.random.PRNGKey(0)

    batch = 8
    input_size = 32
    hidden_layer_size = 64
    hidden_layers = 2
    output_size = 4

    k_x, k_p = jax.random.split(key)
    x = jax.random.normal(k_x, (batch, input_size), jnp.float32)
    params, raw = init_mlp_params(k_p, input_size, hidden_layer_size,
                                  hidden_layers, output_size)

    out = mlp_forward(x, params, output_size=output_size)
    out = jax.block_until_ready(out)

    ref = mlp_forward_ref(x, raw)
    assert out.shape == (batch, output_size)
    assert jnp.allclose(out, ref, atol=1e-4, rtol=1e-4), "mismatch vs reference"

    print("KERNEL_OK")
</pallas_src>

<mosaic_0001>
module attributes {stable_mosaic.version = 11 : i64} {
  func.func @_fused_mlp_kernel(%arg0: i32, %arg1: memref<8x128xf32, #tpu.memory_space<vmem>>, %arg2: memref<128x128xf32, #tpu.memory_space<vmem>>, %arg3: memref<1x128xf32, #tpu.memory_space<vmem>>, %arg4: memref<1x128xf32, #tpu.memory_space<vmem>>, %arg5: memref<128x128xf32, #tpu.memory_space<vmem>>, %arg6: memref<1x128xf32, #tpu.memory_space<vmem>>, %arg7: memref<1x128xf32, #tpu.memory_space<vmem>>, %arg8: memref<128x128xf32, #tpu.memory_space<vmem>>, %arg9: memref<1x128xf32, #tpu.memory_space<vmem>>, %arg10: memref<8x128xf32, #tpu.memory_space<vmem>>) attributes {dimension_semantics = [#tpu.dimension_semantics<parallel>], iteration_bounds = array<i64: 1>, scalar_prefetch = 0 : i64, scratch_operands = 0 : i64, tpu.core_type = #tpu.core_type<tc>, window_params = [{transform_indices = @transform_0, window_bounds = array<i64: 8, 128>}, {pipeline_mode = #tpu.pipeline_mode<synchronous>, transform_indices = @transform_1, window_bounds = array<i64: 128, 128>}, {pipeline_mode = #tpu.pipeline_mode<synchronous>, transform_indices = @transform_2, window_bounds = array<i64: 1, 128>}, {pipeline_mode = #tpu.pipeline_mode<synchronous>, transform_indices = @transform_3, window_bounds = array<i64: 1, 128>}, {pipeline_mode = #tpu.pipeline_mode<synchronous>, transform_indices = @transform_4, window_bounds = array<i64: 128, 128>}, {pipeline_mode = #tpu.pipeline_mode<synchronous>, transform_indices = @transform_5, window_bounds = array<i64: 1, 128>}, {pipeline_mode = #tpu.pipeline_mode<synchronous>, transform_indices = @transform_6, window_bounds = array<i64: 1, 128>}, {pipeline_mode = #tpu.pipeline_mode<synchronous>, transform_indices = @transform_7, window_bounds = array<i64: 128, 128>}, {pipeline_mode = #tpu.pipeline_mode<synchronous>, transform_indices = @transform_8, window_bounds = array<i64: 1, 128>}, {transform_indices = @transform_9, window_bounds = array<i64: 8, 128>}]} {
    %c0 = arith.constant 0 : index
    %c0_0 = arith.constant 0 : index
    %0 = vector.load %arg1[%c0, %c0_0] : memref<8x128xf32, #tpu.memory_space<vmem>>, vector<8x128xf32>
    %c0_1 = arith.constant 0 : index
    %c0_2 = arith.constant 0 : index
    %1 = vector.load %arg2[%c0_1, %c0_2] : memref<128x128xf32, #tpu.memory_space<vmem>>, vector<128x128xf32>
    %cst = arith.constant dense<0.000000e+00> : vector<8x128xf32>
    %2 = tpu.matmul %0, %1, %cst {dimension_numbers = #tpu.dot_dimension_numbers<[1], [0], [0], [1], [0, 0, 1, 1], [], []>} : vector<8x128xf32>, vector<128x128xf32>, vector<8x128xf32> -> vector<8x128xf32>
    %c0_3 = arith.constant 0 : index
    %c0_4 = arith.constant 0 : index
    %3 = vector.load %arg3[%c0_3, %c0_4] : memref<1x128xf32, #tpu.memory_space<vmem>>, vector<1x128xf32>
    %4 = vector.broadcast %3 : vector<1x128xf32> to vector<8x128xf32>
    %5 = arith.mulf %2, %4 : vector<8x128xf32>
    %c0_5 = arith.constant 0 : index
    %c0_6 = arith.constant 0 : index
    %6 = vector.load %arg4[%c0_5, %c0_6] : memref<1x128xf32, #tpu.memory_space<vmem>>, vector<1x128xf32>
    %7 = vector.broadcast %6 : vector<1x128xf32> to vector<8x128xf32>
    %8 = arith.addf %5, %7 : vector<8x128xf32>
    %cst_7 = arith.constant 0.000000e+00 : f32
    %9 = vector.broadcast %cst_7 : f32 to vector<8x128xf32>
    %10 = arith.maximumf %8, %9 : vector<8x128xf32>
    %c0_8 = arith.constant 0 : index
    %c0_9 = arith.constant 0 : index
    %11 = vector.load %arg5[%c0_8, %c0_9] : memref<128x128xf32, #tpu.memory_space<vmem>>, vector<128x128xf32>
    %cst_10 = arith.constant dense<0.000000e+00> : vector<8x128xf32>
    %12 = tpu.matmul %10, %11, %cst_10 {dimension_numbers = #tpu.dot_dimension_numbers<[1], [0], [0], [1], [0, 0, 1, 1], [], []>} : vector<8x128xf32>, vector<128x128xf32>, vector<8x128xf32> -> vector<8x128xf32>
    %c0_11 = arith.constant 0 : index
    %c0_12 = arith.constant 0 : index
    %13 = vector.load %arg6[%c0_11, %c0_12] : memref<1x128xf32, #tpu.memory_space<vmem>>, vector<1x128xf32>
    %14 = vector.broadcast %13 : vector<1x128xf32> to vector<8x128xf32>
    %15 = arith.mulf %12, %14 : vector<8x128xf32>
    %c0_13 = arith.constant 0 : index
    %c0_14 = arith.constant 0 : index
    %16 = vector.load %arg7[%c0_13, %c0_14] : memref<1x128xf32, #tpu.memory_space<vmem>>, vector<1x128xf32>
    %17 = vector.broadcast %16 : vector<1x128xf32> to vector<8x128xf32>
    %18 = arith.addf %15, %17 : vector<8x128xf32>
    %cst_15 = arith.constant 0.000000e+00 : f32
    %19 = vector.broadcast %cst_15 : f32 to vector<8x128xf32>
    %20 = arith.maximumf %18, %19 : vector<8x128xf32>
    %c0_16 = arith.constant 0 : index
    %c0_17 = arith.constant 0 : index
    %21 = vector.load %arg8[%c0_16, %c0_17] : memref<128x128xf32, #tpu.memory_space<vmem>>, vector<128x128xf32>
    %cst_18 = arith.constant dense<0.000000e+00> : vector<8x128xf32>
    %22 = tpu.matmul %20, %21, %cst_18 {dimension_numbers = #tpu.dot_dimension_numbers<[1], [0], [0], [1], [0, 0, 1, 1], [], []>} : vector<8x128xf32>, vector<128x128xf32>, vector<8x128xf32> -> vector<8x128xf32>
    %c0_19 = arith.constant 0 : index
    %c0_20 = arith.constant 0 : index
    %23 = vector.load %arg9[%c0_19, %c0_20] : memref<1x128xf32, #tpu.memory_space<vmem>>, vector<1x128xf32>
    %24 = vector.broadcast %23 : vector<1x128xf32> to vector<8x128xf32>
    %25 = arith.addf %22, %24 : vector<8x128xf32>
    %c0_21 = arith.constant 0 : index
    %c0_22 = arith.constant 0 : index
    %26 = vector.load %arg10[%c0_21, %c0_22] : memref<8x128xf32, #tpu.memory_space<vmem>>, vector<8x128xf32>
    tpu.vector_store %arg10[%c0_21, %c0_22], %25 {strides = array<i32>} : memref<8x128xf32, #tpu.memory_space<vmem>>, vector<8x128xf32>,
    return
  }
  func.func @transform_0(%arg0: i32) -> (i32, i32) {
    %c0_i32 = arith.constant 0 : i32
    %c0_i32_0 = arith.constant 0 : i32
    return %arg0, %c0_i32 : i32, i32
  }
  func.func @transform_1(%arg0: i32) -> (i32, i32) {
    %c0_i32 = arith.constant 0 : i32
    %c0_i32_0 = arith.constant 0 : i32
    %c0_i32_1 = arith.constant 0 : i32
    return %c0_i32, %c0_i32_0 : i32, i32
  }
  func.func @transform_2(%arg0: i32) -> (i32, i32) {
    %c0_i32 = arith.constant 0 : i32
    %c0_i32_0 = arith.constant 0 : i32
    %c0_i32_1 = arith.constant 0 : i32
    return %c0_i32, %c0_i32_0 : i32, i32
  }
  func.func @transform_3(%arg0: i32) -> (i32, i32) {
    %c0_i32 = arith.constant 0 : i32
    %c0_i32_0 = arith.constant 0 : i32
    %c0_i32_1 = arith.constant 0 : i32
    return %c0_i32, %c0_i32_0 : i32, i32
  }
  func.func @transform_4(%arg0: i32) -> (i32, i32) {
    %c0_i32 = arith.constant 0 : i32
    %c0_i32_0 = arith.constant 0 : i32
    %c0_i32_1 = arith.constant 0 : i32
    return %c0_i32, %c0_i32_0 : i32, i32
  }
  func.func @transform_5(%arg0: i32) -> (i32, i32) {
    %c0_i32 = arith.constant 0 : i32
    %c0_i32_0 = arith.constant 0 : i32
    %c0_i32_1 = arith.constant 0 : i32
    return %c0_i32, %c0_i32_0 : i32, i32
  }
  func.func @transform_6(%arg0: i32) -> (i32, i32) {
    %c0_i32 = arith.constant 0 : i32
    %c0_i32_0 = arith.constant 0 : i32
    %c0_i32_1 = arith.constant 0 : i32
    return %c0_i32, %c0_i32_0 : i32, i32
  }
  func.func @transform_7(%arg0: i32) -> (i32, i32) {
    %c0_i32 = arith.constant 0 : i32
    %c0_i32_0 = arith.constant 0 : i32
    %c0_i32_1 = arith.constant 0 : i32
    return %c0_i32, %c0_i32_0 : i32, i32
  }
  func.func @transform_8(%arg0: i32) -> (i32, i32) {
    %c0_i32 = arith.constant 0 : i32
    %c0_i32_0 = arith.constant 0 : i32
    %c0_i32_1 = arith.constant 0 : i32
    return %c0_i32, %c0_i32_0 : i32, i32
  }
  func.func @transform_9(%arg0: i32) -> (i32, i32) {
    %c0_i32 = arith.constant 0 : i32
    %c0_i32_0 = arith.constant 0 : i32
    return %arg0, %c0_i32 : i32, i32
  }
}

</mosaic_0001>

<llo_original>
// kernel: mlp_forward.1
$region0: #{mlp_forward.1}
  #allocation0 [shape = 'u32[]', space=smem, size = 0x4, offset = 0x4, fixed_abs, tag = 'smem constant byte address 0x4 - core index']
  #allocation1 [shape = 'u32[144,128]{1,0:T(1,128)}', space=vmem, size = 0x12000, scoped, tag = 'internal scratch']
  %s0 = inlined_call_operand.vmem [shape: f32[8,128], index: 0, kind: input, shape index: {}]
  %s1 = inlined_call_operand.hbm [shape: f32[128,128], index: 1, kind: input, shape index: {}]
  %s2 = inlined_call_operand.vmem [shape: f32[1,128], index: 2, kind: input, shape index: {}]
  %s3 = inlined_call_operand.vmem [shape: f32[1,128], index: 3, kind: input, shape index: {}]
  %s4 = inlined_call_operand.hbm [shape: f32[128,128], index: 4, kind: input, shape index: {}]
  %s5 = inlined_call_operand.vmem [shape: f32[1,128], index: 5, kind: input, shape index: {}]
  %s6 = inlined_call_operand.vmem [shape: f32[1,128], index: 6, kind: input, shape index: {}]
  %s7 = inlined_call_operand.hbm [shape: f32[128,128], index: 7, kind: input, shape index: {}]
  %s8 = inlined_call_operand.vmem [shape: f32[1,128], index: 8, kind: input, shape index: {}]
  %s9 = inlined_call_operand.vmem [shape: f32[8,128], index: 9, kind: output, shape index: {}]
  %s10 = sld [smem:[#allocation0]]
  $region58: #{mlp_forward.1} parent=0
    _
  %s12 = ssub.s32 1, %s10
  %s13 = scalar_select 0, %s12, %s10
  $region1: #{mlp_forward.1} parent=0
    #allocation2 [shape = 'u8[65536]{0}', space=vmem, size = 0x10000, scoped, tag = 'input window, operand 1, single buffered']
    #allocation3 [shape = 's32[1]{0}', space=sflag, size = 0x4, scoped, tag = 'scoped memory for mlp_forward.1']
    #allocation4 [shape = 'u8[65536]{0}', space=vmem, size = 0x10000, scoped, tag = 'input window, operand 4, single buffered']
    #allocation5 [shape = 's32[1]{0}', space=sflag, size = 0x4, scoped, tag = 'scoped memory for mlp_forward.1']
    #allocation6 [shape = 'u8[65536]{0}', space=vmem, size = 0x10000, scoped, tag = 'input window, operand 7, single buffered']
    %14 = vsyncpa [#allocation3], 0
    %15 = vsyncpa [#allocation5], 0
    // Predicated region
    $region2: #{mlp_forward.1} parent=1 // pred_check
      _
    $region3: #{mlp_forward.1} parent=1 // pred_check_branch
      %17 = sbr.rel (0) target = $region5
    $region4: #{mlp_forward.1} parent=1 // pred_region
      _
    $region5: #{mlp_forward.1} parent=1 // pred_fallthru
      _
    // Predicated region
    $region6: #{mlp_forward.1} parent=1 // pred_check
      _
    $region7: #{mlp_forward.1} parent=1 // pred_check_branch
      %19 = sbr.rel (0) target = $region9
    $region8: #{mlp_forward.1} parent=1 // pred_region
      %s21 = ssub.s32 2048, 2048
      %22 = vsyncadd [#allocation3], %s21
      %s23 = sshll.u32 [#allocation2], 4
      %s24 = int_to_ptr.vmem [resolvable:$true] %s23
      %29 = dma.hbm_to_vmem [thread:$0]  %s1, 2048, %s24, [#allocation3], 128, 128, 8
    $region9: #{mlp_forward.1} parent=1 // pred_fallthru
      _
    // Predicated region
    $region10: #{mlp_forward.1} parent=1 // pred_check
      _
    $region11: #{mlp_forward.1} parent=1 // pred_check_branch
      %31 = sbr.rel (0) target = $region13
    $region12: #{mlp_forward.1} parent=1 // pred_region
      _
    $region13: #{mlp_forward.1} parent=1 // pred_fallthru
      _
    // Predicated region
    $region14: #{mlp_forward.1} parent=1 // pred_check
      _
    $region15: #{mlp_forward.1} parent=1 // pred_check_branch
      %33 = sbr.rel (0) target = $region17
    $region16: #{mlp_forward.1} parent=1 // pred_region
      _
    $region17: #{mlp_forward.1} parent=1 // pred_fallthru
      _
    // Predicated region
    $region18: #{mlp_forward.1} parent=1 // pred_check
      _
    $region19: #{mlp_forward.1} parent=1 // pred_check_branch
      %35 = sbr.rel (0) target = $region21
    $region20: #{mlp_forward.1} parent=1 // pred_region
      %s37 = ssub.s32 2048, 2048
      %38 = vsyncadd [#allocation5], %s37
      %s39 = sshll.u32 [#allocation4], 4
      %s40 = int_to_ptr.vmem [resolvable:$true] %s39
      %45 = dma.hbm_to_vmem [thread:$0]  %s4, 2048, %s40, [#allocation5], 128, 128, 8
    $region21: #{mlp_forward.1} parent=1 // pred_fallthru
      _
    // Predicated region
    $region22: #{mlp_forward.1} parent=1 // pred_check
      _
    $region23: #{mlp_forward.1} parent=1 // pred_check_branch
      %47 = sbr.rel (0) target = $region25
    $region24: #{mlp_forward.1} parent=1 // pred_region
      _
    $region25: #{mlp_forward.1} parent=1 // pred_fallthru
      _
    // Predicated region
    $region26: #{mlp_forward.1} parent=1 // pred_check
      _
    $region27: #{mlp_forward.1} parent=1 // pred_check_branch
      %49 = sbr.rel (0) target = $region29
    $region28: #{mlp_forward.1} parent=1 // pred_region
      _
    $region29: #{mlp_forward.1} parent=1 // pred_fallthru
      _
    // Predicated region
    $region30: #{mlp_forward.1} parent=1 // pred_check
      _
    $region31: #{mlp_forward.1} parent=1 // pred_check_branch
      %51 = sbr.rel (0) target = $region33
    $region32: #{mlp_forward.1} parent=1 // pred_region
      %s53 = ssub.s32 2048, 2048
      %54 = vsyncadd [#allocation5], %s53
      %s55 = sshll.u32 [#allocation6], 4
      %s56 = int_to_ptr.vmem [resolvable:$true] %s55
      %61 = dma.hbm_to_vmem [thread:$0]  %s7, 2048, %s56, [#allocation5], 128, 128, 8
    $region33: #{mlp_forward.1} parent=1 // pred_fallthru
      _
    // Predicated region
    $region34: #{mlp_forward.1} parent=1 // pred_check
      _
    $region35: #{mlp_forward.1} parent=1 // pred_check_branch
      %63 = sbr.rel (0) target = $region37
    $region36: #{mlp_forward.1} parent=1 // pred_region
      _
    $region37: #{mlp_forward.1} parent=1 // pred_fallthru
      _
    // Predicated region
    $region38: #{mlp_forward.1} parent=1 // pred_check
      _
    $region39: #{mlp_forward.1} parent=1 // pred_check_branch
      %65 = sbr.rel (0) target = $region41
    $region40: #{mlp_forward.1} parent=1 // pred_region
      %66 = dma.done [#allocation3], 2048
    $region41: #{mlp_forward.1} parent=1 // pred_fallthru
      _
    // Predicated region
    $region42: #{mlp_forward.1} parent=1 // pred_check
      _
    $region43: #{mlp_forward.1} parent=1 // pred_check_branch
      %68 = sbr.rel (0) target = $region45
    $region44: #{mlp_forward.1} parent=1 // pred_region
      %69 = dma.done [#allocation5], 2048
    $region45: #{mlp_forward.1} parent=1 // pred_fallthru
      _
    // Predicated region
    $region46: #{mlp_forward.1} parent=1 // pred_check
      _
    $region47: #{mlp_forward.1} parent=1 // pred_check_branch
      %71 = sbr.rel (0) target = $region49
    $region48: #{mlp_forward.1} parent=1 // pred_region
      %72 = dma.done [#allocation5], 2048
    $region49: #{mlp_forward.1} parent=1 // pred_fallthru
      _
    %v73 = vld [vmem:[%s0] sm:$0xff]
    %v74 = vld [vmem:[#allocation2] sm:$0xff]
    %v75 = vld [vmem:[#allocation2 + $0x8] sm:$0xff]
    %v76 = vld [vmem:[#allocation2 + $0x10] sm:$0xff]
    %v77 = vld [vmem:[#allocation2 + $0x18] sm:$0xff]
    %v78 = vld [vmem:[#allocation2 + $0x20] sm:$0xff]
    %v79 = vld [vmem:[#allocation2 + $0x28] sm:$0xff]
    %v80 = vld [vmem:[#allocation2 + $0x30] sm:$0xff]
    %v81 = vld [vmem:[#allocation2 + $0x38] sm:$0xff]
    %v82 = vld [vmem:[#allocation2 + $0x40] sm:$0xff]
    %v83 = vld [vmem:[#allocation2 + $0x48] sm:$0xff]
    %v84 = vld [vmem:[#allocation2 + $0x50] sm:$0xff]
    %v85 = vld [vmem:[#allocation2 + $0x58] sm:$0xff]
    %v86 = vld [vmem:[#allocation2 + $0x60] sm:$0xff]
    %v87 = vld [vmem:[#allocation2 + $0x68] sm:$0xff]
    %v88 = vld [vmem:[#allocation2 + $0x70] sm:$0xff]
    %v89 = vld [vmem:[#allocation2 + $0x78] sm:$0xff]
    %90 = vmatprep.subr.mxu0 0.0
    %91 = vmatpush1.msra.mxu0 %v74
    %92 = vmatprep.subr.mxu0 0.0
    %93 = vmatpush1.msra.mxu0 %v75
    %94 = vmatprep.subr.mxu0 0.0
    %95 = vmatpush1.msra.mxu0 %v76
    %96 = vmatprep.subr.mxu0 0.0
    %97 = vmatpush1.msra.mxu0 %v77
    %98 = vmatprep.subr.mxu0 0.0
    %99 = vmatpush1.msra.mxu0 %v78
    %100 = vmatprep.subr.mxu0 0.0
    %101 = vmatpush1.msra.mxu0 %v79
    %102 = vmatprep.subr.mxu0 0.0
    %103 = vmatpush1.msra.mxu0 %v80
    %104 = vmatprep.subr.mxu0 0.0
    %105 = vmatpush1.msra.mxu0 %v81
    %106 = vmatprep.subr.mxu0 0.0
    %107 = vmatpush1.msra.mxu0 %v82
    %108 = vmatprep.subr.mxu0 0.0
    %109 = vmatpush1.msra.mxu0 %v83
    %110 = vmatprep.subr.mxu0 0.0
    %111 = vmatpush1.msra.mxu0 %v84
    %112 = vmatprep.subr.mxu0 0.0
    %113 = vmatpush1.msra.mxu0 %v85
    %114 = vmatprep.subr.mxu0 0.0
    %115 = vmatpush1.msra.mxu0 %v86
    %116 = vmatprep.subr.mxu0 0.0
    %117 = vmatpush1.msra.mxu0 %v87
    %118 = vmatprep.subr.mxu0 0.0
    %119 = vmatpush1.msra.mxu0 %v88
    %120 = vmatprep.subr.mxu0 0.0
    %121 = vmatpush1.msra.mxu0 %v89
    %122 = vmatprep.subr.mxu0 0.0
    %123 = vmatpush1.msra.mxu0 0.0
    %124 = vmatprep.subr.mxu0 0.0
    %125 = vmatpush1.msra.mxu0 0.0
    %126 = vmatprep.subr.mxu0 0.0
    %127 = vmatpush1.msra.mxu0 0.0
    %128 = vmatprep.subr.mxu0 0.0
    %129 = vmatpush1.msra.mxu0 0.0
    %130 = vmatprep.subr.mxu0 0.0
    %131 = vmatpush1.msra.mxu0 0.0
    %132 = vmatprep.subr.mxu0 0.0
    %133 = vmatpush1.msra.mxu0 0.0
    %134 = vmatprep.subr.mxu0 0.0
    %135 = vmatpush1.msra.mxu0 0.0
    %136 = vmatprep.subr.mxu0 0.0
    %137 = vmatpush1.msra.mxu0 0.0
    %138 = vmatprep.subr.mxu0 0.0
    %139 = vmatpush1.msra.mxu0 0.0
    %140 = vmatprep.subr.mxu0 0.0
    %141 = vmatpush1.msra.mxu0 0.0
    %142 = vmatprep.subr.mxu0 0.0
    %143 = vmatpush1.msra.mxu0 0.0
    %144 = vmatprep.subr.mxu0 0.0
    %145 = vmatpush1.msra.mxu0 0.0
    %146 = vmatprep.subr.mxu0 0.0
    %147 = vmatpush1.msra.mxu0 0.0
    %148 = vmatprep.subr.mxu0 0.0
    %149 = vmatpush1.msra.mxu0 0.0
    %150 = vmatprep.subr.mxu0 0.0
    %151 = vmatpush1.msra.mxu0 0.0
    %152 = vmatprep.subr.mxu0 0.0
    %153 = vmatpush1.msra.mxu0 0.0
    %154 = vmatprep.mubr.f32.mxu0 0.0
    %155 = vmatmul.mubr.f32.gmra.mrb[0].mxu0 %v73
    %v156 = vpop.f32.mrb[0].mxu0
    %v157 = vadd.f32 0.0, %v156
    %v158 = vpop.f32.mrb[0].mxu0
    %159 = vdwg.mxu0
    %v160 = vld [vmem:[%s2] sm:$0x1]
    %v162 = vlaneseq
    %v163 = vshrl.u32 %v162, 7
    %v164 = vsub.s32 0, %v163
    %v165 = vrot.slane %v160, %v164
    %v167 = vmul.f32 %v157, %v165
    %v168 = vld [vmem:[%s3] sm:$0x1]
    %v170 = vlaneseq
    %v171 = vshrl.u32 %v170, 7
    %v172 = vsub.s32 0, %v171
    %v173 = vrot.slane %v168, %v172
    %v175 = vadd.f32 %v167, %v173
    %v176 = vmax.f32 %v175, 0.0
    %v177 = vld [vmem:[#allocation4] sm:$0xff]
    %v178 = vld [vmem:[#allocation4 + $0x8] sm:$0xff]
    %v179 = vld [vmem:[#allocation4 + $0x10] sm:$0xff]
    %v180 = vld [vmem:[#allocation4 + $0x18] sm:$0xff]
    %v181 = vld [vmem:[#allocation4 + $0x20] sm:$0xff]
    %v182 = vld [vmem:[#allocation4 + $0x28] sm:$0xff]
    %v183 = vld [vmem:[#allocation4 + $0x30] sm:$0xff]
    %v184 = vld [vmem:[#allocation4 + $0x38] sm:$0xff]
    %v185 = vld [vmem:[#allocation4 + $0x40] sm:$0xff]
    %v186 = vld [vmem:[#allocation4 + $0x48] sm:$0xff]
    %v187 = vld [vmem:[#allocation4 + $0x50] sm:$0xff]
    %v188 = vld [vmem:[#allocation4 + $0x58] sm:$0xff]
    %v189 = vld [vmem:[#allocation4 + $0x60] sm:$0xff]
    %v190 = vld [vmem:[#allocation4 + $0x68] sm:$0xff]
    %v191 = vld [vmem:[#allocation4 + $0x70] sm:$0xff]
    %v192 = vld [vmem:[#allocation4 + $0x78] sm:$0xff]
    %193 = vmatprep.subr.mxu0 0.0
    %194 = vmatpush1.msra.mxu0 %v177
    %195 = vmatprep.subr.mxu0 0.0
    %196 = vmatpush1.msra.mxu0 %v178
    %197 = vmatprep.subr.mxu0 0.0
    %198 = vmatpush1.msra.mxu0 %v179
    %199 = vmatprep.subr.mxu0 0.0
    %200 = vmatpush1.msra.mxu0 %v180
    %201 = vmatprep.subr.mxu0 0.0
    %202 = vmatpush1.msra.mxu0 %v181
    %203 = vmatprep.subr.mxu0 0.0
    %204 = vmatpush1.msra.mxu0 %v182
    %205 = vmatprep.subr.mxu0 0.0
    %206 = vmatpush1.msra.mxu0 %v183
    %207 = vmatprep.subr.mxu0 0.0
    %208 = vmatpush1.msra.mxu0 %v184
    %209 = vmatprep.subr.mxu0 0.0
    %210 = vmatpush1.msra.mxu0 %v185
    %211 = vmatprep.subr.mxu0 0.0
    %212 = vmatpush1.msra.mxu0 %v186
    %213 = vmatprep.subr.mxu0 0.0
    %214 = vmatpush1.msra.mxu0 %v187
    %215 = vmatprep.subr.mxu0 0.0
    %216 = vmatpush1.msra.mxu0 %v188
    %217 = vmatprep.subr.mxu0 0.0
    %218 = vmatpush1.msra.mxu0 %v189
    %219 = vmatprep.subr.mxu0 0.0
    %220 = vmatpush1.msra.mxu0 %v190
    %221 = vmatprep.subr.mxu0 0.0
    %222 = vmatpush1.msra.mxu0 %v191
    %223 = vmatprep.subr.mxu0 0.0
    %224 = vmatpush1.msra.mxu0 %v192
    %225 = vmatprep.subr.mxu0 0.0
    %226 = vmatpush1.msra.mxu0 0.0
    %227 = vmatprep.subr.mxu0 0.0
    %228 = vmatpush1.msra.mxu0 0.0
    %229 = vmatprep.subr.mxu0 0.0
    %230 = vmatpush1.msra.mxu0 0.0
    %231 = vmatprep.subr.mxu0 0.0
    %232 = vmatpush1.msra.mxu0 0.0
    %233 = vmatprep.subr.mxu0 0.0
    %234 = vmatpush1.msra.mxu0 0.0
    %235 = vmatprep.subr.mxu0 0.0
    %236 = vmatpush1.msra.mxu0 0.0
    %237 = vmatprep.subr.mxu0 0.0
    %238 = vmatpush1.msra.mxu0 0.0
    %239 = vmatprep.subr.mxu0 0.0
    %240 = vmatpush1.msra.mxu0 0.0
    %241 = vmatprep.subr.mxu0 0.0
    %242 = vmatpush1.msra.mxu0 0.0
    %243 = vmatprep.subr.mxu0 0.0
    %244 = vmatpush1.msra.mxu0 0.0
    %245 = vmatprep.subr.mxu0 0.0
    %246 = vmatpush1.msra.mxu0 0.0
    %247 = vmatprep.subr.mxu0 0.0
    %248 = vmatpush1.msra.mxu0 0.0
    %249 = vmatprep.subr.mxu0 0.0
    %250 = vmatpush1.msra.mxu0 0.0
    %251 = vmatprep.subr.mxu0 0.0
    %252 = vmatpush1.msra.mxu0 0.0
    %253 = vmatprep.subr.mxu0 0.0
    %254 = vmatpush1.msra.mxu0 0.0
    %255 = vmatprep.subr.mxu0 0.0
    %256 = vmatpush1.msra.mxu0 0.0
    %257 = vmatprep.mubr.f32.mxu0 0.0
    %258 = vmatmul.mubr.f32.gmra.mrb[0].mxu0 %v176
    %v259 = vpop.f32.mrb[0].mxu0
    %v260 = vadd.f32 0.0, %v259
    %v261 = vpop.f32.mrb[0].mxu0
    %262 = vdwg.mxu0
    %v263 = vld [vmem:[%s5] sm:$0x1]
    %v265 = vlaneseq
    %v266 = vshrl.u32 %v265, 7
    %v267 = vsub.s32 0, %v266
    %v268 = vrot.slane %v263, %v267
    %v270 = vmul.f32 %v260, %v268
    %v271 = vld [vmem:[%s6] sm:$0x1]
    %v273 = vlaneseq
    %v274 = vshrl.u32 %v273, 7
    %v275 = vsub.s32 0, %v274
    %v276 = vrot.slane %v271, %v275
    %v278 = vadd.f32 %v270, %v276
    %v279 = vmax.f32 %v278, 0.0
    %v280 = vld [vmem:[#allocation6] sm:$0xff]
    %v281 = vld [vmem:[#allocation6 + $0x8] sm:$0xff]
    %v282 = vld [vmem:[#allocation6 + $0x10] sm:$0xff]
    %v283 = vld [vmem:[#allocation6 + $0x18] sm:$0xff]
    %v284 = vld [vmem:[#allocation6 + $0x20] sm:$0xff]
    %v285 = vld [vmem:[#allocation6 + $0x28] sm:$0xff]
    %v286 = vld [vmem:[#allocation6 + $0x30] sm:$0xff]
    %v287 = vld [vmem:[#allocation6 + $0x38] sm:$0xff]
    %v288 = vld [vmem:[#allocation6 + $0x40] sm:$0xff]
    %v289 = vld [vmem:[#allocation6 + $0x48] sm:$0xff]
    %v290 = vld [vmem:[#allocation6 + $0x50] sm:$0xff]
    %v291 = vld [vmem:[#allocation6 + $0x58] sm:$0xff]
    %v292 = vld [vmem:[#allocation6 + $0x60] sm:$0xff]
    %v293 = vld [vmem:[#allocation6 + $0x68] sm:$0xff]
    %v294 = vld [vmem:[#allocation6 + $0x70] sm:$0xff]
    %v295 = vld [vmem:[#allocation6 + $0x78] sm:$0xff]
    %v296 = vld [vmem:[%s8] sm:$0x1]
    %v298 = vlaneseq
    %v299 = vshrl.u32 %v298, 7
    %v300 = vsub.s32 0, %v299
    %v301 = vrot.slane %v296, %v300
    %303 = vmatprep.subr.mxu0 0.0
    %304 = vmatpush1.msra.mxu0 %v280
    %305 = vmatprep.subr.mxu0 0.0
    %306 = vmatpush1.msra.mxu0 %v281
    %307 = vmatprep.subr.mxu0 0.0
    %308 = vmatpush1.msra.mxu0 %v282
    %309 = vmatprep.subr.mxu0 0.0
    %310 = vmatpush1.msra.mxu0 %v283
    %311 = vmatprep.subr.mxu0 0.0
    %312 = vmatpush1.msra.mxu0 %v284
    %313 = vmatprep.subr.mxu0 0.0
    %314 = vmatpush1.msra.mxu0 %v285
    %315 = vmatprep.subr.mxu0 0.0
    %316 = vmatpush1.msra.mxu0 %v286
    %317 = vmatprep.subr.mxu0 0.0
    %318 = vmatpush1.msra.mxu0 %v287
    %319 = vmatprep.subr.mxu0 0.0
    %320 = vmatpush1.msra.mxu0 %v288
    %321 = vmatprep.subr.mxu0 0.0
    %322 = vmatpush1.msra.mxu0 %v289
    %323 = vmatprep.subr.mxu0 0.0
    %324 = vmatpush1.msra.mxu0 %v290
    %325 = vmatprep.subr.mxu0 0.0
    %326 = vmatpush1.msra.mxu0 %v291
    %327 = vmatprep.subr.mxu0 0.0
    %328 = vmatpush1.msra.mxu0 %v292
    %329 = vmatprep.subr.mxu0 0.0
    %330 = vmatpush1.msra.mxu0 %v293
    %331 = vmatprep.subr.mxu0 0.0
    %332 = vmatpush1.msra.mxu0 %v294
    %333 = vmatprep.subr.mxu0 0.0
    %334 = vmatpush1.msra.mxu0 %v295
    %335 = vmatprep.subr.mxu0 0.0
    %336 = vmatpush1.msra.mxu0 0.0
    %337 = vmatprep.subr.mxu0 0.0
    %338 = vmatpush1.msra.mxu0 0.0
    %339 = vmatprep.subr.mxu0 0.0
    %340 = vmatpush1.msra.mxu0 0.0
    %341 = vmatprep.subr.mxu0 0.0
    %342 = vmatpush1.msra.mxu0 0.0
    %343 = vmatprep.subr.mxu0 0.0
    %344 = vmatpush1.msra.mxu0 0.0
    %345 = vmatprep.subr.mxu0 0.0
    %346 = vmatpush1.msra.mxu0 0.0
    %347 = vmatprep.subr.mxu0 0.0
    %348 = vmatpush1.msra.mxu0 0.0
    %349 = vmatprep.subr.mxu0 0.0
    %350 = vmatpush1.msra.mxu0 0.0
    %351 = vmatprep.subr.mxu0 0.0
    %352 = vmatpush1.msra.mxu0 0.0
    %353 = vmatprep.subr.mxu0 0.0
    %354 = vmatpush1.msra.mxu0 0.0
    %355 = vmatprep.subr.mxu0 0.0
    %356 = vmatpush1.msra.mxu0 0.0
    %357 = vmatprep.subr.mxu0 0.0
    %358 = vmatpush1.msra.mxu0 0.0
    %359 = vmatprep.subr.mxu0 0.0
    %360 = vmatpush1.msra.mxu0 0.0
    %361 = vmatprep.subr.mxu0 0.0
    %362 = vmatpush1.msra.mxu0 0.0
    %363 = vmatprep.subr.mxu0 0.0
    %364 = vmatpush1.msra.mxu0 0.0
    %365 = vmatprep.subr.mxu0 0.0
    %366 = vmatpush1.msra.mxu0 0.0
    %367 = vmatprep.mubr.f32.mxu0 0.0
    %368 = vmatmul.mubr.f32.gmra.mrb[0].mxu0 %v279
    %v369 = vpop.f32.mrb[0].mxu0
    %v370 = vadd.f32 %v301, %v369
    %v371 = vpop.f32.mrb[0].mxu0
    %372 = vdwg.mxu0
    %373 = vst [vmem:[%s9] sm:$0xff] %v370
    // Predicated region
    $region50: #{mlp_forward.1} parent=1 // pred_check
      _
    $region51: #{mlp_forward.1} parent=1 // pred_check_branch
      %375 = sbr.rel (0) target = $region53
    $region52: #{mlp_forward.1} parent=1 // pred_region
      _
    $region53: #{mlp_forward.1} parent=1 // pred_fallthru
      _
    // Predicated region
    $region54: #{mlp_forward.1} parent=1 // pred_check
      _
    $region55: #{mlp_forward.1} parent=1 // pred_check_branch
      %377 = sbr.rel (0) target = $region57
    $region56: #{mlp_forward.1} parent=1 // pred_region
      _
    $region57: #{mlp_forward.1} parent=1 // pred_fallthru
      _
    %378 = vsyncpa [#allocation3], 1
    %379 = vsyncpa [#allocation5], 1

</llo_original>
